<compile_context>
chip_gen: v7x
topology: tpu7x:2x2x1
jax: 0.10.0
libtpu: 0.0.40
codegen_flags: <defaults>
</compile_context>

<pallas_src>
import functools

import jax
import jax.numpy as jnp
from jax import lax
from jax.experimental import pallas as pl
from jax.experimental.pallas import tpu as pltpu

D_IN, D_H1, D_H2, D_OUT = 8, 6, 4, 1
PACK = 128 // D_IN            # 16 original rows packed per 128-lane vector row
ROW_GRAN = PACK * 8           # 128 rows = one (8 sublane, 128 lane) f32 tile
CHUNK_P = 512                 # packed rows per in-kernel compute chunk
MIN_TILE_P = 1024             # >= 1 MiB of f32 x per grid step before splitting


def _round_up(a, b):
    return (a + b - 1) // b * b


def mlp_kernel(x_ref, w1_ref, b1_ref, w2_ref, b2_ref, w3_ref, b3_ref, o_ref,
               *, chunk_p, num_chunks):
    # x_ref: (tile_p, 128) f32 = 16 packed rows x 8 features per row.
    # Weights are block-diagonal kron(I16, W) in bf16; biases are f32.
    def chunk(c, carry):
        off = pl.multiple_of(c * chunk_p, chunk_p)
        # Stream f32 from HBM; cast to bf16 on the VPU (hidden under the DMA).
        x = x_ref[pl.ds(off, chunk_p), :].astype(w1_ref.dtype)

        # Linear1 + ReLU   -> (chunk_p, 96), f32 accumulation on the MXU.
        h1 = jnp.dot(x, w1_ref[...], preferred_element_type=jnp.float32) + b1_ref[...]
        h1 = jnp.maximum(h1, 0.0).astype(x.dtype)

        # Linear2 + ReLU   -> (chunk_p, 64)
        h2 = jnp.dot(h1, w2_ref[...], preferred_element_type=jnp.float32) + b2_ref[...]
        h2 = jnp.maximum(h2, 0.0).astype(x.dtype)

        # Linear3 + Sigmoid -> (chunk_p, 16): 16 scalar outputs per packed row.
        h3 = jnp.dot(h2, w3_ref[...], preferred_element_type=jnp.float32) + b3_ref[...]
        o_ref[pl.ds(off, chunk_p), :] = jax.nn.sigmoid(h3)
        return carry

    lax.fori_loop(0, num_chunks, chunk, None, unroll=True)


def pack_params(w1, b1, w2, b2, w3, b3, compute_dtype=jnp.bfloat16):
    """Precompute the block-diagonal (16-row packed) weights ONCE (hoisted)."""
    eye = jnp.eye(PACK, dtype=jnp.float32)
    w1p = jnp.kron(eye, w1.astype(jnp.float32)).astype(compute_dtype)    # (128, 96)
    w2p = jnp.kron(eye, w2.astype(jnp.float32)).astype(compute_dtype)    # ( 96, 64)
    w3p = jnp.kron(eye, w3.astype(jnp.float32)).astype(compute_dtype)    # ( 64, 16)
    b1p = jnp.tile(b1.reshape(1, -1).astype(jnp.float32), (1, PACK))     # (1, 96)
    b2p = jnp.tile(b2.reshape(1, -1).astype(jnp.float32), (1, PACK))     # (1, 64)
    b3p = jnp.tile(b3.reshape(1, -1).astype(jnp.float32), (1, PACK))     # (1, 16)
    return w1p, b1p, w2p, b2p, w3p, b3p


@functools.partial(jax.jit, static_argnames=("tile_rows",))
def mlp_forward(x, w1p, b1p, w2p, b2p, w3p, b3p, *, tile_rows=65536):
    n, d = x.shape
    assert d == D_IN

    # Pad only to the 128-row packing granule (<= 127 zero rows), not to the
    # tile size -> no full-array copy through HBM.
    n_pad = _round_up(n, ROW_GRAN)
    if n_pad != n:
        x = jnp.concatenate([x, jnp.zeros((n_pad - n, D_IN), x.dtype)], axis=0)

    # Pack 16 rows -> one lane-dense 128-wide row (free, row-major reshape).
    num_p = n_pad // PACK
    xp = x.reshape(num_p, PACK * D_IN)

    # Tile selection: large roofline-friendly DMA blocks; keep >= ~4 grid steps
    # for big batches (v7x megacore, pipeline overlap); respect sublane (8) and
    # in-kernel chunk granularity.
    tile_p = max(8, min(tile_rows // PACK, num_p))
    tile_p = (tile_p // 8) * 8
    if num_p >= 4 * MIN_TILE_P:
        tile_p = min(tile_p, _round_up(pl.cdiv(num_p, 4), CHUNK_P))
    if tile_p >= CHUNK_P:
        tile_p = (tile_p // CHUNK_P) * CHUNK_P
    chunk_p = min(CHUNK_P, tile_p)
    num_chunks = tile_p // chunk_p
    grid_len = pl.cdiv(num_p, tile_p)

    def const(shape):   # resident block: index never changes -> DMA'd once
        return pl.BlockSpec(shape, lambda i: (0, 0))

    w_bytes = ((w1p.size + w2p.size + w3p.size) * jnp.dtype(w1p.dtype).itemsize
               + (b1p.size + b2p.size + b3p.size) * 4)
    cost = pl.CostEstimate(
        # Actual block-diagonal (lane-padded) MXU work, not just useful FLOPs.
        flops=2 * num_p * (PACK * D_IN * PACK * D_H1
                           + PACK * D_H1 * PACK * D_H2
                           + PACK * D_H2 * PACK * D_OUT),
        transcendentals=n_pad,
        bytes_accessed=(num_p * PACK * D_IN * 4      # x stream (f32)
                        + num_p * PACK * D_OUT * 4   # output (f32)
                        + w_bytes),
    )

    kernel = functools.partial(mlp_kernel, chunk_p=chunk_p, num_chunks=num_chunks)

    out = pl.pallas_call(
        kernel,
        out_shape=jax.ShapeDtypeStruct((num_p, PACK * D_OUT), jnp.float32),
        grid=(grid_len,),
        in_specs=[
            pl.BlockSpec((tile_p, PACK * D_IN), lambda i: (i, 0)),   # x stream (f32)
            const((PACK * D_IN, PACK * D_H1)),                       # w1p (128, 96)
            const((1, PACK * D_H1)),                                 # b1p
            const((PACK * D_H1, PACK * D_H2)),                       # w2p ( 96, 64)
            const((1, PACK * D_H2)),                                 # b2p
            const((PACK * D_H2, PACK * D_OUT)),                      # w3p ( 64, 16)
            const((1, PACK * D_OUT)),                                # b3p
        ],
        out_specs=pl.BlockSpec((tile_p, PACK * D_OUT), lambda i: (i, 0)),
        compiler_params=pltpu.CompilerParams(
            dimension_semantics=("parallel",),
            vmem_limit_bytes=32 * 1024 * 1024,
        ),
        cost_estimate=cost,
    )(xp, w1p, b1p, w2p, b2p, w3p, b3p)

    # (num_p, 16) row-major is exactly (n_pad, 1); drop the padding rows.
    return out.reshape(n_pad, D_OUT)[:n]


def init_params(key):
    # Deterministic init mimicking torch.nn.Linear default (+/- 1/sqrt(fan_in)).
    dims = [(D_IN, D_H1), (D_H1, D_H2), (D_H2, D_OUT)]
    params = []
    for i, (fan_in, fan_out) in enumerate(dims):
        kw, kb = jax.random.split(jax.random.fold_in(key, i))
        bound = 1.0 / jnp.sqrt(float(fan_in))
        w = jax.random.uniform(kw, (fan_in, fan_out), jnp.float32, -bound, bound)
        b = jax.random.uniform(kb, (1, fan_out), jnp.float32, -bound, bound)
        params += [w, b]
    return params


def mlp_reference(x, params, compute_dtype):
    w1, b1, w2, b2, w3, b3 = params
    h = x.astype(compute_dtype)
    h = jnp.maximum(jnp.dot(h, w1.astype(compute_dtype),
                            preferred_element_type=jnp.float32) + b1, 0.0)
    h = h.astype(compute_dtype)
    h = jnp.maximum(jnp.dot(h, w2.astype(compute_dtype),
                            preferred_element_type=jnp.float32) + b2, 0.0)
    h = h.astype(compute_dtype)
    h = jnp.dot(h, w3.astype(compute_dtype),
                preferred_element_type=jnp.float32) + b3
    return jax.nn.sigmoid(h)


if __name__ == "__main__":
    key = jax.random.PRNGKey(0)
    k_x, k_p = jax.random.split(key)

    params = init_params(k_p)
    packed = pack_params(*params)          # hoisted: packed weights built once

    # Small batch, deliberately not a multiple of the 16-row packing.
    batch = 200
    x = jax.random.normal(k_x, (batch, D_IN), dtype=jnp.float32)
    y = jax.block_until_ready(mlp_forward(x, *packed))
    assert y.shape == (batch, D_OUT)

    ref_bf16 = mlp_reference(x, params, jnp.bfloat16)   # identical compute recipe
    ref_f32 = mlp_reference(x, params, jnp.float32)     # looser sanity check
    assert jnp.allclose(y, ref_bf16, atol=2e-3, rtol=0.0)
    assert jnp.allclose(y, ref_f32, atol=5e-2, rtol=0.0)

    # Second shape: exercises a multi-step grid, a partial last block and the
    # pad-to-128-rows path.
    batch2 = 3000
    x2 = jax.random.normal(jax.random.fold_in(k_x, 1), (batch2, D_IN), jnp.float32)
    y2 = jax.block_until_ready(mlp_forward(x2, *packed, tile_rows=2048))
    assert y2.shape == (batch2, D_OUT)
    ref2 = mlp_reference(x2, params, jnp.bfloat16)
    assert jnp.allclose(y2, ref2, atol=2e-3, rtol=0.0)

    print("KERNEL_OK")
</pallas_src>

<mosaic_0001>
module attributes {stable_mosaic.version = 11 : i64} {
  func.func @mlp_kernel(%arg0: i32, %arg1: memref<16x128xf32, #tpu.memory_space<vmem>>, %arg2: memref<128x96xbf16, #tpu.memory_space<vmem>>, %arg3: memref<1x96xf32, #tpu.memory_space<vmem>>, %arg4: memref<96x64xbf16, #tpu.memory_space<vmem>>, %arg5: memref<1x64xf32, #tpu.memory_space<vmem>>, %arg6: memref<64x16xbf16, #tpu.memory_space<vmem>>, %arg7: memref<1x16xf32, #tpu.memory_space<vmem>>, %arg8: memref<16x16xf32, #tpu.memory_space<vmem>>) attributes {dimension_semantics = [#tpu.dimension_semantics<parallel>], iteration_bounds = array<i64: 1>, scalar_prefetch = 0 : i64, scratch_operands = 0 : i64, tpu.core_type = #tpu.core_type<tc>, window_params = [{transform_indices = @transform_0, window_bounds = array<i64: 16, 128>}, {pipeline_mode = #tpu.pipeline_mode<synchronous>, transform_indices = @transform_1, window_bounds = array<i64: 128, 96>}, {pipeline_mode = #tpu.pipeline_mode<synchronous>, transform_indices = @transform_2, window_bounds = array<i64: 1, 96>}, {pipeline_mode = #tpu.pipeline_mode<synchronous>, transform_indices = @transform_3, window_bounds = array<i64: 96, 64>}, {pipeline_mode = #tpu.pipeline_mode<synchronous>, transform_indices = @transform_4, window_bounds = array<i64: 1, 64>}, {pipeline_mode = #tpu.pipeline_mode<synchronous>, transform_indices = @transform_5, window_bounds = array<i64: 64, 16>}, {pipeline_mode = #tpu.pipeline_mode<synchronous>, transform_indices = @transform_6, window_bounds = array<i64: 1, 16>}, {transform_indices = @transform_7, window_bounds = array<i64: 16, 16>}]} {
    %c0_i32 = arith.constant 0 : i32
    %c16_i32 = arith.constant 16 : i32
    %0 = arith.muli %c0_i32, %c16_i32 : i32
    %1 = tpu.assume_multiple %0, 16 : i32
    %2 = arith.index_cast %1 : i32 to index
    %c0 = arith.constant 0 : index
    %3 = vector.load %arg1[%2, %c0] : memref<16x128xf32, #tpu.memory_space<vmem>>, vector<16x128xf32>
    %4 = arith.truncf %3 : vector<16x128xf32> to vector<16x128xbf16>
    %c0_0 = arith.constant 0 : index
    %c0_1 = arith.constant 0 : index
    %5 = vector.load %arg2[%c0_0, %c0_1] : memref<128x96xbf16, #tpu.memory_space<vmem>>, vector<128x96xbf16>
    %cst = arith.constant dense<0.000000e+00> : vector<16x96xf32>
    %6 = tpu.matmul %4, %5, %cst {dimension_numbers = #tpu.dot_dimension_numbers<[1], [0], [0], [1], [0, 0, 1, 1], [], []>} : vector<16x128xbf16>, vector<128x96xbf16>, vector<16x96xf32> -> vector<16x96xf32>
    %c0_2 = arith.constant 0 : index
    %c0_3 = arith.constant 0 : index
    %7 = vector.load %arg3[%c0_2, %c0_3] : memref<1x96xf32, #tpu.memory_space<vmem>>, vector<1x96xf32>
    %8 = vector.broadcast %7 : vector<1x96xf32> to vector<16x96xf32>
    %9 = arith.addf %6, %8 : vector<16x96xf32>
    %cst_4 = arith.constant 0.000000e+00 : f32
    %10 = vector.broadcast %cst_4 : f32 to vector<16x96xf32>
    %11 = arith.maximumf %9, %10 : vector<16x96xf32>
    %12 = arith.truncf %11 : vector<16x96xf32> to vector<16x96xbf16>
    %c0_5 = arith.constant 0 : index
    %c0_6 = arith.constant 0 : index
    %13 = vector.load %arg4[%c0_5, %c0_6] : memref<96x64xbf16, #tpu.memory_space<vmem>>, vector<96x64xbf16>
    %cst_7 = arith.constant dense<0.000000e+00> : vector<16x64xf32>
    %14 = tpu.matmul %12, %13, %cst_7 {dimension_numbers = #tpu.dot_dimension_numbers<[1], [0], [0], [1], [0, 0, 1, 1], [], []>} : vector<16x96xbf16>, vector<96x64xbf16>, vector<16x64xf32> -> vector<16x64xf32>
    %c0_8 = arith.constant 0 : index
    %c0_9 = arith.constant 0 : index
    %15 = vector.load %arg5[%c0_8, %c0_9] : memref<1x64xf32, #tpu.memory_space<vmem>>, vector<1x64xf32>
    %16 = vector.broadcast %15 : vector<1x64xf32> to vector<16x64xf32>
    %17 = arith.addf %14, %16 : vector<16x64xf32>
    %cst_10 = arith.constant 0.000000e+00 : f32
    %18 = vector.broadcast %cst_10 : f32 to vector<16x64xf32>
    %19 = arith.maximumf %17, %18 : vector<16x64xf32>
    %20 = arith.truncf %19 : vector<16x64xf32> to vector<16x64xbf16>
    %c0_11 = arith.constant 0 : index
    %c0_12 = arith.constant 0 : index
    %21 = vector.load %arg6[%c0_11, %c0_12] : memref<64x16xbf16, #tpu.memory_space<vmem>>, vector<64x16xbf16>
    %cst_13 = arith.constant dense<0.000000e+00> : vector<16x16xf32>
    %22 = tpu.matmul %20, %21, %cst_13 {dimension_numbers = #tpu.dot_dimension_numbers<[1], [0], [0], [1], [0, 0, 1, 1], [], []>} : vector<16x64xbf16>, vector<64x16xbf16>, vector<16x16xf32> -> vector<16x16xf32>
    %c0_14 = arith.constant 0 : index
    %c0_15 = arith.constant 0 : index
    %23 = vector.load %arg7[%c0_14, %c0_15] : memref<1x16xf32, #tpu.memory_space<vmem>>, vector<1x16xf32>
    %24 = vector.broadcast %23 : vector<1x16xf32> to vector<16x16xf32>
    %25 = arith.addf %22, %24 : vector<16x16xf32>
    %26 = arith.negf %25 : vector<16x16xf32>
    %27 = math.exp %26 : vector<16x16xf32>
    %cst_16 = arith.constant 1.000000e+00 : f32
    %28 = vector.broadcast %cst_16 : f32 to vector<16x16xf32>
    %29 = arith.addf %28, %27 : vector<16x16xf32>
    %30 = arith.divf %28, %29 : vector<16x16xf32>
    %31 = arith.index_cast %1 : i32 to index
    %c0_17 = arith.constant 0 : index
    %32 = vector.load %arg8[%31, %c0_17] : memref<16x16xf32, #tpu.memory_space<vmem>>, vector<16x16xf32>
    tpu.vector_store %arg8[%31, %c0_17], %30 {strides = array<i32>} : memref<16x16xf32, #tpu.memory_space<vmem>>, vector<16x16xf32>,
    %c1_i32 = arith.constant 1 : i32
    return
  }
  func.func @transform_0(%arg0: i32) -> (i32, i32) {
    %c0_i32 = arith.constant 0 : i32
    %c0_i32_0 = arith.constant 0 : i32
    return %arg0, %c0_i32 : i32, i32
  }
  func.func @transform_1(%arg0: i32) -> (i32, i32) {
    %c0_i32 = arith.constant 0 : i32
    %c0_i32_0 = arith.constant 0 : i32
    %c0_i32_1 = arith.constant 0 : i32
    return %c0_i32, %c0_i32_0 : i32, i32
  }
  func.func @transform_2(%arg0: i32) -> (i32, i32) {
    %c0_i32 = arith.constant 0 : i32
    %c0_i32_0 = arith.constant 0 : i32
    %c0_i32_1 = arith.constant 0 : i32
    return %c0_i32, %c0_i32_0 : i32, i32
  }
  func.func @transform_3(%arg0: i32) -> (i32, i32) {
    %c0_i32 = arith.constant 0 : i32
    %c0_i32_0 = arith.constant 0 : i32
    %c0_i32_1 = arith.constant 0 : i32
    return %c0_i32, %c0_i32_0 : i32, i32
  }
  func.func @transform_4(%arg0: i32) -> (i32, i32) {
    %c0_i32 = arith.constant 0 : i32
    %c0_i32_0 = arith.constant 0 : i32
    %c0_i32_1 = arith.constant 0 : i32
    return %c0_i32, %c0_i32_0 : i32, i32
  }
  func.func @transform_5(%arg0: i32) -> (i32, i32) {
    %c0_i32 = arith.constant 0 : i32
    %c0_i32_0 = arith.constant 0 : i32
    %c0_i32_1 = arith.constant 0 : i32
    return %c0_i32, %c0_i32_0 : i32, i32
  }
  func.func @transform_6(%arg0: i32) -> (i32, i32) {
    %c0_i32 = arith.constant 0 : i32
    %c0_i32_0 = arith.constant 0 : i32
    %c0_i32_1 = arith.constant 0 : i32
    return %c0_i32, %c0_i32_0 : i32, i32
  }
  func.func @transform_7(%arg0: i32) -> (i32, i32) {
    %c0_i32 = arith.constant 0 : i32
    %c0_i32_0 = arith.constant 0 : i32
    return %arg0, %c0_i32 : i32, i32
  }
}

</mosaic_0001>

<llo_original>
// kernel: mlp_forward.1
$region0: #{mlp_forward.1}
  #allocation0 [shape = 'u32[]', space=smem, size = 0x4, offset = 0x4, fixed_abs, tag = 'smem constant byte address 0x4 - core index']
  #allocation1 [shape = 'u32[144,128]{1,0:T(1,128)}', space=vmem, size = 0x12000, scoped, tag = 'internal scratch']
  %s0 = inlined_call_operand.vmem [shape: f32[16,128], index: 0, kind: input, shape index: {}]
  %s1 = inlined_call_operand.vmem [shape: bf16[128,96], index: 1, kind: input, shape index: {}]
  %s2 = inlined_call_operand.vmem [shape: f32[1,96], index: 2, kind: input, shape index: {}]
  %s3 = inlined_call_operand.vmem [shape: bf16[96,64], index: 3, kind: input, shape index: {}]
  %s4 = inlined_call_operand.vmem [shape: f32[1,64], index: 4, kind: input, shape index: {}]
  %s5 = inlined_call_operand.vmem [shape: bf16[64,16], index: 5, kind: input, shape index: {}]
  %s6 = inlined_call_operand.vmem [shape: f32[1,16], index: 6, kind: input, shape index: {}]
  %s7 = inlined_call_operand.vmem [shape: f32[16,16], index: 7, kind: output, shape index: {}]
  %s8 = sld [smem:[#allocation0]]
  $region38: #{mlp_forward.1} parent=0
    _
  %s10 = ssub.s32 1, %s8
  %s11 = scalar_select 0, %s10, %s8
  // Predicated region
  $region2: #{mlp_forward.1} parent=0 // pred_check
    _
  $region3: #{mlp_forward.1} parent=0 // pred_check_branch
    %13 = sbr.rel (0) target = $region5
  $region4: #{mlp_forward.1} parent=0 // pred_region
    _
  $region5: #{mlp_forward.1} parent=0 // pred_fallthru
    _
  // Predicated region
  $region6: #{mlp_forward.1} parent=0 // pred_check
    _
  $region7: #{mlp_forward.1} parent=0 // pred_check_branch
    %15 = sbr.rel (0) target = $region9
  $region8: #{mlp_forward.1} parent=0 // pred_region
    _
  $region9: #{mlp_forward.1} parent=0 // pred_fallthru
    _
  // Predicated region
  $region10: #{mlp_forward.1} parent=0 // pred_check
    _
  $region11: #{mlp_forward.1} parent=0 // pred_check_branch
    %17 = sbr.rel (0) target = $region13
  $region12: #{mlp_forward.1} parent=0 // pred_region
    _
  $region13: #{mlp_forward.1} parent=0 // pred_fallthru
    _
  // Predicated region
  $region14: #{mlp_forward.1} parent=0 // pred_check
    _
  $region15: #{mlp_forward.1} parent=0 // pred_check_branch
    %19 = sbr.rel (0) target = $region17
  $region16: #{mlp_forward.1} parent=0 // pred_region
    _
  $region17: #{mlp_forward.1} parent=0 // pred_fallthru
    _
  // Predicated region
  $region18: #{mlp_forward.1} parent=0 // pred_check
    _
  $region19: #{mlp_forward.1} parent=0 // pred_check_branch
    %21 = sbr.rel (0) target = $region21
  $region20: #{mlp_forward.1} parent=0 // pred_region
    _
  $region21: #{mlp_forward.1} parent=0 // pred_fallthru
    _
  // Predicated region
  $region22: #{mlp_forward.1} parent=0 // pred_check
    _
  $region23: #{mlp_forward.1} parent=0 // pred_check_branch
    %23 = sbr.rel (0) target = $region25
  $region24: #{mlp_forward.1} parent=0 // pred_region
    _
  $region25: #{mlp_forward.1} parent=0 // pred_fallthru
    _
  // Predicated region
  $region26: #{mlp_forward.1} parent=0 // pred_check
    _
  $region27: #{mlp_forward.1} parent=0 // pred_check_branch
    %25 = sbr.rel (0) target = $region29
  $region28: #{mlp_forward.1} parent=0 // pred_region
    _
  $region29: #{mlp_forward.1} parent=0 // pred_fallthru
    _
  %v27 = vld [vmem:[%s0] sm:$0xff]
  %v28 = vld [vmem:[%s0 + $0x8] sm:$0xff]
  %v29 = vpack.c.bf16 %v28, %v27
  %v30 = vld [vmem:[%s1] sm:$0xf]
  %v31 = vld [vmem:[%s1 + $0x4] sm:$0xf]
  %v32 = vld [vmem:[%s1 + $0x8] sm:$0xf]
  %v33 = vld [vmem:[%s1 + $0xc] sm:$0xf]
  %v34 = vld [vmem:[%s1 + $0x10] sm:$0xf]
  %v35 = vld [vmem:[%s1 + $0x14] sm:$0xf]
  %v36 = vld [vmem:[%s1 + $0x18] sm:$0xf]
  %v37 = vld [vmem:[%s1 + $0x1c] sm:$0xf]
  %v38 = vld [vmem:[%s1 + $0x20] sm:$0xf]
  %v39 = vld [vmem:[%s1 + $0x24] sm:$0xf]
  %v40 = vld [vmem:[%s1 + $0x28] sm:$0xf]
  %v41 = vld [vmem:[%s1 + $0x2c] sm:$0xf]
  %v42 = vld [vmem:[%s1 + $0x30] sm:$0xf]
  %v43 = vld [vmem:[%s1 + $0x34] sm:$0xf]
  %v44 = vld [vmem:[%s1 + $0x38] sm:$0xf]
  %v45 = vld [vmem:[%s1 + $0x3c] sm:$0xf]
  %v46 = vld [vmem:[%s2] sm:$0x1]
  %v48 = vlaneseq
  %v49 = vshrl.u32 %v48, 7
  %v50 = vsub.s32 0, %v49
  %v51 = vrot.slane %v46, %v50
  %v69 = vunpack.c.l.b16 %v30
  %v70 = vunpack.c.l.b16 %v31
  %v71 = vunpack.c.l.b16 %v32
  %v72 = vunpack.c.l.b16 %v33
  %v73 = vunpack.c.l.b16 %v34
  %v74 = vunpack.c.l.b16 %v35
  %v75 = vunpack.c.l.b16 %v36
  %v76 = vunpack.c.l.b16 %v37
  %v77 = vunpack.c.l.b16 %v38
  %v78 = vunpack.c.l.b16 %v39
  %v79 = vunpack.c.l.b16 %v40
  %v80 = vunpack.c.l.b16 %v41
  %v81 = vunpack.c.l.b16 %v42
  %v82 = vunpack.c.l.b16 %v43
  %v83 = vunpack.c.l.b16 %v44
  %v84 = vunpack.c.l.b16 %v45
  %v85 = vpack.c.b16 %v70, %v69
  %v86 = vpack.c.b16 %v72, %v71
  %v87 = vpack.c.b16 %v74, %v73
  %v88 = vpack.c.b16 %v76, %v75
  %v89 = vpack.c.b16 %v78, %v77
  %v90 = vpack.c.b16 %v80, %v79
  %v91 = vpack.c.b16 %v82, %v81
  %v92 = vpack.c.b16 %v84, %v83
  %101 = vmatprep.subr.bf16.mxu0 0
  %102 = vmatpush1.bf16.msra.mxu0 %v85
  %103 = vmatprep.subr.bf16.mxu0 0
  %104 = vmatpush1.bf16.msra.mxu0 %v86
  %105 = vmatprep.subr.bf16.mxu0 0
  %106 = vmatpush1.bf16.msra.mxu0 %v87
  %107 = vmatprep.subr.bf16.mxu0 0
  %108 = vmatpush1.bf16.msra.mxu0 %v88
  %109 = vmatprep.subr.bf16.mxu0 0
  %110 = vmatpush1.bf16.msra.mxu0 %v89
  %111 = vmatprep.subr.bf16.mxu0 0
  %112 = vmatpush1.bf16.msra.mxu0 %v90
  %113 = vmatprep.subr.bf16.mxu0 0
  %114 = vmatpush1.bf16.msra.mxu0 %v91
  %115 = vmatprep.subr.bf16.mxu0 0
  %116 = vmatpush1.bf16.msra.mxu0 %v92
  %117 = vmatprep.subr.bf16.mxu0 0
  %118 = vmatpush1.bf16.msra.mxu0 0
  %119 = vmatprep.subr.bf16.mxu0 0
  %120 = vmatpush1.bf16.msra.mxu0 0
  %121 = vmatprep.subr.bf16.mxu0 0
  %122 = vmatpush1.bf16.msra.mxu0 0
  %123 = vmatprep.subr.bf16.mxu0 0
  %124 = vmatpush1.bf16.msra.mxu0 0
  %125 = vmatprep.subr.bf16.mxu0 0
  %126 = vmatpush1.bf16.msra.mxu0 0
  %127 = vmatprep.subr.bf16.mxu0 0
  %128 = vmatpush1.bf16.msra.mxu0 0
  %129 = vmatprep.subr.bf16.mxu0 0
  %130 = vmatpush1.bf16.msra.mxu0 0
  %131 = vmatprep.subr.bf16.mxu0 0
  %132 = vmatpush1.bf16.msra.mxu0 0
  %133 = vmatprep.mubr.bf16.mxu0 0
  %134 = vmatmul.mubr.bf16.gmra.mrb[0].mxu0 %v29
  %v135 = vpop.f32.mrb[0].mxu0
  %v136 = vadd.f32 %v51, %v135
  %v137 = vpop.f32.mrb[0].mxu0
  %v138 = vpop.f32.mrb[0].mxu0
  %v139 = vadd.f32 %v51, %v138
  %v140 = vpop.f32.mrb[0].mxu0
  %141 = vdwg.mxu0
  %v142 = vmax.f32 %v136, 0.0
  %v143 = vmax.f32 %v139, 0.0
  %v144 = vpack.c.bf16 %v143, %v142
  %v145 = vld [vmem:[%s3] sm:$0xf]
  %v146 = vld [vmem:[%s3 + $0x4] sm:$0xf]
  %v147 = vld [vmem:[%s3 + $0x8] sm:$0xf]
  %v148 = vld [vmem:[%s3 + $0xc] sm:$0xf]
  %v149 = vld [vmem:[%s3 + $0x10] sm:$0xf]
  %v150 = vld [vmem:[%s3 + $0x14] sm:$0xf]
  %v151 = vld [vmem:[%s3 + $0x18] sm:$0xf]
  %v152 = vld [vmem:[%s3 + $0x1c] sm:$0xf]
  %v153 = vld [vmem:[%s3 + $0x20] sm:$0xf]
  %v154 = vld [vmem:[%s3 + $0x24] sm:$0xf]
  %v155 = vld [vmem:[%s3 + $0x28] sm:$0xf]
  %v156 = vld [vmem:[%s3 + $0x2c] sm:$0xf]
  %v157 = vld [vmem:[%s4] sm:$0x1]
  %v159 = vlaneseq
  %v160 = vshrl.u32 %v159, 7
  %v161 = vsub.s32 0, %v160
  %v162 = vrot.slane %v157, %v161
  %v176 = vunpack.c.l.b16 %v145
  %v177 = vunpack.c.l.b16 %v146
  %v178 = vunpack.c.l.b16 %v147
  %v179 = vunpack.c.l.b16 %v148
  %v180 = vunpack.c.l.b16 %v149
  %v181 = vunpack.c.l.b16 %v150
  %v182 = vunpack.c.l.b16 %v151
  %v183 = vunpack.c.l.b16 %v152
  %v184 = vunpack.c.l.b16 %v153
  %v185 = vunpack.c.l.b16 %v154
  %v186 = vunpack.c.l.b16 %v155
  %v187 = vunpack.c.l.b16 %v156
  %v188 = vpack.c.b16 %v177, %v176
  %v189 = vpack.c.b16 %v179, %v178
  %v190 = vpack.c.b16 %v181, %v180
  %v191 = vpack.c.b16 %v183, %v182
  %v192 = vpack.c.b16 %v185, %v184
  %v193 = vpack.c.b16 %v187, %v186
  %vm200 = vcmask 785408
  %v202 = vsel %vm200, %v144, 0
  %204 = vmatprep.subr.bf16.mxu0 0
  %205 = vmatpush1.bf16.msra.mxu0 %v188
  %206 = vmatprep.subr.bf16.mxu0 0
  %207 = vmatpush1.bf16.msra.mxu0 %v189
  %208 = vmatprep.subr.bf16.mxu0 0
  %209 = vmatpush1.bf16.msra.mxu0 %v190
  %210 = vmatprep.subr.bf16.mxu0 0
  %211 = vmatpush1.bf16.msra.mxu0 %v191
  %212 = vmatprep.subr.bf16.mxu0 0
  %213 = vmatpush1.bf16.msra.mxu0 %v192
  %214 = vmatprep.subr.bf16.mxu0 0
  %215 = vmatpush1.bf16.msra.mxu0 %v193
  %216 = vmatprep.subr.bf16.mxu0 0
  %217 = vmatpush1.bf16.msra.mxu0 0
  %218 = vmatprep.subr.bf16.mxu0 0
  %219 = vmatpush1.bf16.msra.mxu0 0
  %220 = vmatprep.subr.bf16.mxu0 0
  %221 = vmatpush1.bf16.msra.mxu0 0
  %222 = vmatprep.subr.bf16.mxu0 0
  %223 = vmatpush1.bf16.msra.mxu0 0
  %224 = vmatprep.subr.bf16.mxu0 0
  %225 = vmatpush1.bf16.msra.mxu0 0
  %226 = vmatprep.subr.bf16.mxu0 0
  %227 = vmatpush1.bf16.msra.mxu0 0
  %228 = vmatprep.subr.bf16.mxu0 0
  %229 = vmatpush1.bf16.msra.mxu0 0
  %230 = vmatprep.subr.bf16.mxu0 0
  %231 = vmatpush1.bf16.msra.mxu0 0
  %232 = vmatprep.subr.bf16.mxu0 0
  %233 = vmatpush1.bf16.msra.mxu0 0
  %234 = vmatprep.subr.bf16.mxu0 0
  %235 = vmatpush1.bf16.msra.mxu0 0
  %236 = vmatprep.mubr.bf16.mxu0 0
  %237 = vmatmul.mubr.bf16.gmra.mrb[0].mxu0 %v202
  %v238 = vpop.f32.mrb[0].mxu0
  %v239 = vadd.f32 %v162, %v238
  %v240 = vpop.f32.mrb[0].mxu0
  %v241 = vpop.f32.mrb[0].mxu0
  %v242 = vadd.f32 %v162, %v241
  %v243 = vpop.f32.mrb[0].mxu0
  %244 = vdwg.mxu0
  %v245 = vmax.f32 %v239, 0.0
  %v246 = vmax.f32 %v242, 0.0
  %v247 = vpack.c.bf16 %v246, %v245
  %v248 = vld [vmem:[%s5] sm:$0xf]
  %v249 = vld [vmem:[%s5 + $0x4] sm:$0xf]
  %v250 = vld [vmem:[%s5 + $0x8] sm:$0xf]
  %v251 = vld [vmem:[%s5 + $0xc] sm:$0xf]
  %v252 = vld [vmem:[%s5 + $0x10] sm:$0xf]
  %v253 = vld [vmem:[%s5 + $0x14] sm:$0xf]
  %v254 = vld [vmem:[%s5 + $0x18] sm:$0xf]
  %v255 = vld [vmem:[%s5 + $0x1c] sm:$0xf]
  %v256 = vld [vmem:[%s6] sm:$0x1]
  %v258 = vlaneseq
  %v259 = vshrl.u32 %v258, 7
  %v260 = vsub.s32 0, %v259
  %v261 = vrot.slane %v256, %v260
  %v271 = vunpack.c.l.b16 %v248
  %v272 = vunpack.c.l.b16 %v249
  %v273 = vunpack.c.l.b16 %v250
  %v274 = vunpack.c.l.b16 %v251
  %v275 = vunpack.c.l.b16 %v252
  %v276 = vunpack.c.l.b16 %v253
  %v277 = vunpack.c.l.b16 %v254
  %v278 = vunpack.c.l.b16 %v255
  %v279 = vpack.c.b16 %v272, %v271
  %v280 = vpack.c.b16 %v274, %v273
  %v281 = vpack.c.b16 %v276, %v275
  %v282 = vpack.c.b16 %v278, %v277
  %vm287 = vcmask 523264
  %v289 = vsel %vm287, %v247, 0
  %291 = vmatprep.subr.bf16.mxu0 0
  %292 = vmatpush1.bf16.msra.mxu0 %v279
  %293 = vmatprep.subr.bf16.mxu0 0
  %294 = vmatpush1.bf16.msra.mxu0 %v280
  %295 = vmatprep.subr.bf16.mxu0 0
  %296 = vmatpush1.bf16.msra.mxu0 %v281
  %297 = vmatprep.subr.bf16.mxu0 0
  %298 = vmatpush1.bf16.msra.mxu0 %v282
  %299 = vmatprep.subr.bf16.mxu0 0
  %300 = vmatpush1.bf16.msra.mxu0 0
  %301 = vmatprep.subr.bf16.mxu0 0
  %302 = vmatpush1.bf16.msra.mxu0 0
  %303 = vmatprep.subr.bf16.mxu0 0
  %304 = vmatpush1.bf16.msra.mxu0 0
  %305 = vmatprep.subr.bf16.mxu0 0
  %306 = vmatpush1.bf16.msra.mxu0 0
  %307 = vmatprep.subr.bf16.mxu0 0
  %308 = vmatpush1.bf16.msra.mxu0 0
  %309 = vmatprep.subr.bf16.mxu0 0
  %310 = vmatpush1.bf16.msra.mxu0 0
  %311 = vmatprep.subr.bf16.mxu0 0
  %312 = vmatpush1.bf16.msra.mxu0 0
  %313 = vmatprep.subr.bf16.mxu0 0
  %314 = vmatpush1.bf16.msra.mxu0 0
  %315 = vmatprep.subr.bf16.mxu0 0
  %316 = vmatpush1.bf16.msra.mxu0 0
  %317 = vmatprep.subr.bf16.mxu0 0
  %318 = vmatpush1.bf16.msra.mxu0 0
  %319 = vmatprep.subr.bf16.mxu0 0
  %320 = vmatpush1.bf16.msra.mxu0 0
  %321 = vmatprep.subr.bf16.mxu0 0
  %322 = vmatpush1.bf16.msra.mxu0 0
  %323 = vmatprep.mubr.bf16.mxu0 0
  %324 = vmatmul.mubr.bf16.gmra.mrb[0].mxu0 %v289
  %v325 = vpop.f32.mrb[0].mxu0
  %v326 = vadd.f32 %v261, %v325
  %v327 = vpop.f32.mrb[0].mxu0
  %v328 = vpop.f32.mrb[0].mxu0
  %v329 = vadd.f32 %v261, %v328
  %v330 = vpop.f32.mrb[0].mxu0
  %331 = vdwg.mxu0
  %v332 = vxor.u32 %v326, 2147483648
  %v333 = vxor.u32 %v329, 2147483648
  %v334 = vmul.f32 %v332, 1.442695
  %v335 = vpow.pop %v334
  %v336 = vmul.f32 %v333, 1.442695
  %v337 = vpow.pop %v336
  %v338 = vadd.f32 %v335, 1.0
  %v339 = vadd.f32 %v337, 1.0
  %v340 = vrcp.pop %v338
  %v341 = vmul.f32 1.0, %v340
  %v342 = vrcp.pop %v339
  %v343 = vmul.f32 1.0, %v342
  %vm344 = vcmask 130048
  %345 = vst.msk [vmem:[%s7] sm:$0xff] %vm344, %v341
  %346 = vst.msk [vmem:[%s7 + $0x8] sm:$0xff] %vm344, %v343
  // Predicated region
  $region30: #{mlp_forward.1} parent=0 // pred_check
    _
  $region31: #{mlp_forward.1} parent=0 // pred_check_branch
    %348 = sbr.rel (0) target = $region33
  $region32: #{mlp_forward.1} parent=0 // pred_region
    _
  $region33: #{mlp_forward.1} parent=0 // pred_fallthru
    _
  // Predicated region
  $region34: #{mlp_forward.1} parent=0 // pred_check
    _
  $region35: #{mlp_forward.1} parent=0 // pred_check_branch
    %350 = sbr.rel (0) target = $region37
  $region36: #{mlp_forward.1} parent=0 // pred_region
    _
  $region37: #{mlp_forward.1} parent=0 // pred_fallthru
    _

</llo_original>
